<compile_context>
chip_gen: v7x
topology: tpu7x:2x2x1
jax: 0.10.0
libtpu: 0.0.40
codegen_flags: <defaults>
</compile_context>

<pallas_src>
import functools

import jax
import jax.numpy as jnp
from jax.experimental import pallas as pl
from jax.experimental.pallas import tpu as pltpu


def _round_up(x, m):
    return ((x + m - 1) // m) * m


def _time_embedding_kernel(t_ref, w_ref, b_ref, o_ref, *, n_linear, pack, feat):
    # t_ref: (TM, pack)   w_ref, b_ref: (1, pack*feat)   o_ref: (TM, pack*feat)
    t = t_ref[...].astype(jnp.float32)                       # (TM, P)
    tm = t.shape[0]
    # Expand each time point across its `feat` consecutive output lanes (lane-dense).
    t_exp = jnp.broadcast_to(t[:, :, None], (tm, pack, feat)).reshape(tm, pack * feat)
    raw = t_exp * w_ref[...] + b_ref[...]                    # (TM, P*F), all dense vregs
    # Feature index within each packed sub-row; feature < n_linear -> plain affine,
    # otherwise sin(affine).  sin lands on the EUP slot (free slack when HBM-bound).
    col = jax.lax.broadcasted_iota(jnp.int32, raw.shape, dimension=1)
    is_linear = (col % feat) < n_linear
    o_ref[...] = jnp.where(is_linear, raw, jnp.sin(raw)).astype(o_ref.dtype)


def time_embedding_forward(t, w_lin, b_lin, w_per, b_per, *, tile_m=512):
    """
    t:     (B, L) float32 time stamps
    w_lin: (1, 1), b_lin: (1,)              -- nn.Linear(1, 1)
    w_per: (F-1, 1), b_per: (F-1,)          -- nn.Linear(1, F-1)
    returns (B, L, F) float32
    """
    B, L = t.shape
    n_linear = w_lin.shape[0]                      # = in_features = 1
    F = n_linear + w_per.shape[0]                  # out_features
    N = B * L

    # Lane packing: put `pack` consecutive time points in one 128-lane output row.
    pack = (128 // F) if (F <= 128 and 128 % F == 0) else 1
    lanes = pack * F

    # Pack weights so that features 0..n_linear-1 are the "linear" head and the rest the
    # "periodic" head (matches torch.cat order), then tile across the packed lanes.
    w_all = jnp.concatenate([w_lin.reshape(-1), w_per.reshape(-1)]).astype(jnp.float32)
    b_all = jnp.concatenate([b_lin.reshape(-1), b_per.reshape(-1)]).astype(jnp.float32)
    w_tiled = jnp.tile(w_all, pack).reshape(1, lanes)
    b_tiled = jnp.tile(b_all, pack).reshape(1, lanes)

    # Grid sizing: pad packed-row count so it divides tile_m (no divisibility assert),
    # avoid gross over-padding for tiny inputs, and keep >=2 grid steps when the
    # problem is large enough so v7x's second TensorCore gets work.
    NP = -(-N // pack)
    tile_m = max(8, min(int(tile_m), _round_up(NP, 8)))
    tile_m = _round_up(tile_m, 8)
    while tile_m > 8 and _round_up(NP, tile_m) // tile_m < 2:
        tile_m = max(8, _round_up(tile_m // 2, 8))
    NP_pad = _round_up(NP, tile_m)
    grid = (NP_pad // tile_m,)

    N_pad = NP_pad * pack
    t_flat = t.reshape(N).astype(jnp.float32)
    if N_pad > N:
        t_flat = jnp.pad(t_flat, (0, N_pad - N))
    t_packed = t_flat.reshape(NP_pad, pack)

    out_packed = pl.pallas_call(
        functools.partial(
            _time_embedding_kernel, n_linear=n_linear, pack=pack, feat=F
        ),
        out_shape=jax.ShapeDtypeStruct((NP_pad, lanes), jnp.float32),
        grid_spec=pltpu.PrefetchScalarGridSpec(
            num_scalar_prefetch=0,
            grid=grid,
            in_specs=[
                pl.BlockSpec((tile_m, pack), lambda i: (i, 0)),   # packed time points
                pl.BlockSpec((1, lanes), lambda i: (0, 0)),       # tiled weights (resident)
                pl.BlockSpec((1, lanes), lambda i: (0, 0)),       # tiled biases  (resident)
            ],
            out_specs=pl.BlockSpec((tile_m, lanes), lambda i: (i, 0)),
        ),
        compiler_params=pltpu.CompilerParams(
            dimension_semantics=("parallel",),
        ),
    )(t_packed, w_tiled, b_tiled)

    # Row-major (NP_pad, pack*F) is bit-identical to (NP_pad*pack, F): free reshape.
    out = out_packed.reshape(N_pad, F)[:N].reshape(B, L, F)
    # TODO(synk): dropout is identity in eval mode; training-mode dropout (stateful
    # PRNG masking with pltpu.prng_*) is not implemented here.
    return out


if __name__ == "__main__":
    key = jax.random.PRNGKey(0)
    k_t, k_wl, k_bl, k_wp, k_bp = jax.random.split(key, 5)

    B, L = 2, 8
    in_features = 1          # t.unsqueeze(-1) => last dim is 1
    out_features = 32

    # Deterministic "PyTorch-like" init: U(-1/sqrt(fan_in), 1/sqrt(fan_in)), fan_in=1.
    w_lin = jax.random.uniform(k_wl, (in_features, in_features), minval=-1.0, maxval=1.0)
    b_lin = jax.random.uniform(k_bl, (in_features,), minval=-1.0, maxval=1.0)
    w_per = jax.random.uniform(k_wp, (out_features - 1, in_features), minval=-1.0, maxval=1.0)
    b_per = jax.random.uniform(k_bp, (out_features - 1,), minval=-1.0, maxval=1.0)

    t = jax.random.uniform(k_t, (B, L), minval=0.0, maxval=10.0)

    out = time_embedding_forward(t, w_lin, b_lin, w_per, b_per)
    out = jax.block_until_ready(out)

    # Pure-JAX reference check.
    t3 = t[..., None]
    ref_lin = t3 @ w_lin.T + b_lin
    ref_per = jnp.sin(t3 @ w_per.T + b_per)
    ref = jnp.concatenate([ref_lin, ref_per], axis=-1)
    assert out.shape == (B, L, out_features)
    assert jnp.allclose(out, ref, atol=1e-5, rtol=1e-5)

    print("KERNEL_OK")
</pallas_src>

<mosaic_0001>
module attributes {stable_mosaic.version = 11 : i64} {
  func.func @_time_embedding_kernel(%arg0: i32, %arg1: memref<8x4xf32, #tpu.memory_space<vmem>>, %arg2: memref<1x128xf32, #tpu.memory_space<vmem>>, %arg3: memref<1x128xf32, #tpu.memory_space<vmem>>, %arg4: memref<8x128xf32, #tpu.memory_space<vmem>>) attributes {dimension_semantics = [#tpu.dimension_semantics<parallel>], iteration_bounds = array<i64: 1>, scalar_prefetch = 0 : i64, scratch_operands = 0 : i64, tpu.core_type = #tpu.core_type<tc>, window_params = [{transform_indices = @transform_0, window_bounds = array<i64: 8, 4>}, {pipeline_mode = #tpu.pipeline_mode<synchronous>, transform_indices = @transform_1, window_bounds = array<i64: 1, 128>}, {pipeline_mode = #tpu.pipeline_mode<synchronous>, transform_indices = @transform_2, window_bounds = array<i64: 1, 128>}, {transform_indices = @transform_3, window_bounds = array<i64: 8, 128>}]} {
    %c0 = arith.constant 0 : index
    %c0_0 = arith.constant 0 : index
    %0 = vector.load %arg1[%c0, %c0_0] : memref<8x4xf32, #tpu.memory_space<vmem>>, vector<8x4xf32>
    %1 = vector.shape_cast %0 : vector<8x4xf32> to vector<8x4x1xf32>
    %2 = vector.shape_cast %1 : vector<8x4x1xf32> to vector<8x4x1xf32>
    %3 = vector.broadcast %2 : vector<8x4x1xf32> to vector<8x4x32xf32>
    %4 = vector.shape_cast %3 : vector<8x4x32xf32> to vector<8x128xf32>
    %c0_1 = arith.constant 0 : index
    %c0_2 = arith.constant 0 : index
    %5 = vector.load %arg2[%c0_1, %c0_2] : memref<1x128xf32, #tpu.memory_space<vmem>>, vector<1x128xf32>
    %6 = vector.broadcast %5 : vector<1x128xf32> to vector<8x128xf32>
    %7 = arith.mulf %4, %6 : vector<8x128xf32>
    %c0_3 = arith.constant 0 : index
    %c0_4 = arith.constant 0 : index
    %8 = vector.load %arg3[%c0_3, %c0_4] : memref<1x128xf32, #tpu.memory_space<vmem>>, vector<1x128xf32>
    %9 = vector.broadcast %8 : vector<1x128xf32> to vector<8x128xf32>
    %10 = arith.addf %7, %9 : vector<8x128xf32>
    %11 = tpu.iota {dimensions = array<i32: 1>} : vector<8x128xi32>
    %c32_i32 = arith.constant 32 : i32
    %c0_i32 = arith.constant 0 : i32
    %12 = arith.cmpi eq, %c32_i32, %c0_i32 : i32
    %c1_i32 = arith.constant 1 : i32
    %13 = arith.select %12, %c1_i32, %c32_i32 : i32
    %14 = vector.broadcast %13 : i32 to vector<8x128xi32>
    %15 = arith.remsi %11, %14 : vector<8x128xi32>
    %c0_i32_5 = arith.constant 0 : i32
    %16 = vector.broadcast %c0_i32_5 : i32 to vector<8x128xi32>
    %17 = arith.cmpi ne, %15, %16 : vector<8x128xi32>
    %c0_i32_6 = arith.constant 0 : i32
    %18 = vector.broadcast %c0_i32_6 : i32 to vector<8x128xi32>
    %19 = arith.cmpi slt, %15, %18 : vector<8x128xi32>
    %c0_i32_7 = arith.constant 0 : i32
    %20 = arith.cmpi slt, %13, %c0_i32_7 : i32
    %21 = vector.broadcast %20 : i1 to vector<8x128xi1>
    %22 = vector.broadcast %21 : vector<8x128xi1> to vector<8x128xi1>
    %23 = arith.xori %19, %22 : vector<8x128xi1>
    %24 = arith.andi %23, %17 : vector<8x128xi1>
    %25 = vector.broadcast %13 : i32 to vector<8x128xi32>
    %26 = arith.addi %15, %25 : vector<8x128xi32>
    %27 = arith.select %24, %26, %15 : vector<8x128xi1>, vector<8x128xi32>
    %c1_i32_8 = arith.constant 1 : i32
    %28 = vector.broadcast %c1_i32_8 : i32 to vector<8x128xi32>
    %29 = arith.cmpi slt, %27, %28 : vector<8x128xi32>
    %30 = math.sin %10 : vector<8x128xf32>
    %31 = arith.select %29, %10, %30 : vector<8x128xi1>, vector<8x128xf32>
    %c0_9 = arith.constant 0 : index
    %c0_10 = arith.constant 0 : index
    %32 = vector.load %arg4[%c0_9, %c0_10] : memref<8x128xf32, #tpu.memory_space<vmem>>, vector<8x128xf32>
    tpu.vector_store %arg4[%c0_9, %c0_10], %31 {strides = array<i32>} : memref<8x128xf32, #tpu.memory_space<vmem>>, vector<8x128xf32>,
    return
  }
  func.func @transform_0(%arg0: i32) -> (i32, i32) {
    %c0_i32 = arith.constant 0 : i32
    %c0_i32_0 = arith.constant 0 : i32
    return %arg0, %c0_i32 : i32, i32
  }
  func.func @transform_1(%arg0: i32) -> (i32, i32) {
    %c0_i32 = arith.constant 0 : i32
    %c0_i32_0 = arith.constant 0 : i32
    %c0_i32_1 = arith.constant 0 : i32
    return %c0_i32, %c0_i32_0 : i32, i32
  }
  func.func @transform_2(%arg0: i32) -> (i32, i32) {
    %c0_i32 = arith.constant 0 : i32
    %c0_i32_0 = arith.constant 0 : i32
    %c0_i32_1 = arith.constant 0 : i32
    return %c0_i32, %c0_i32_0 : i32, i32
  }
  func.func @transform_3(%arg0: i32) -> (i32, i32) {
    %c0_i32 = arith.constant 0 : i32
    %c0_i32_0 = arith.constant 0 : i32
    return %arg0, %c0_i32 : i32, i32
  }
}

</mosaic_0001>

<llo_original>
// kernel: tpu_custom_call.1
$region0: #{tpu_custom_call.1}
  #allocation0 [shape = 'u32[]', space=smem, size = 0x4, offset = 0x4, fixed_abs, tag = 'smem constant byte address 0x4 - core index']
  #allocation1 [shape = 'u32[144,128]{1,0:T(1,128)}', space=vmem, size = 0x12000, scoped, tag = 'internal scratch']
  %s0 = inlined_call_operand.vmem [shape: f32[8,4], index: 0, kind: input, shape index: {}]
  %s1 = inlined_call_operand.vmem [shape: f32[1,128], index: 1, kind: input, shape index: {}]
  %s2 = inlined_call_operand.vmem [shape: f32[1,128], index: 2, kind: input, shape index: {}]
  %s3 = inlined_call_operand.hbm [shape: f32[8,128], index: 3, kind: output, shape index: {}]
  %s4 = sld [smem:[#allocation0]]
  $region22: #{tpu_custom_call.1} parent=0
    _
  %s6 = ssub.s32 1, %s4
  %s7 = scalar_select 0, %s6, %s4
  $region1: #{tpu_custom_call.1} parent=0
    #allocation2 [shape = 'u8[4096]{0}', space=vmem, size = 0x1000, scoped, tag = 'output window, operand 0, single buffered']
    #allocation3 [shape = 's32[1]{0}', space=sflag, size = 0x4, scoped, tag = 'scoped memory for tpu_custom_call.1']
    %8 = vsyncpa [#allocation3], 0
    // Predicated region
    $region2: #{tpu_custom_call.1} parent=1 // pred_check
      _
    $region3: #{tpu_custom_call.1} parent=1 // pred_check_branch
      %10 = sbr.rel (0) target = $region5
    $region4: #{tpu_custom_call.1} parent=1 // pred_region
      _
    $region5: #{tpu_custom_call.1} parent=1 // pred_fallthru
      _
    // Predicated region
    $region6: #{tpu_custom_call.1} parent=1 // pred_check
      _
    $region7: #{tpu_custom_call.1} parent=1 // pred_check_branch
      %12 = sbr.rel (0) target = $region9
    $region8: #{tpu_custom_call.1} parent=1 // pred_region
      _
    $region9: #{tpu_custom_call.1} parent=1 // pred_fallthru
      _
    // Predicated region
    $region10: #{tpu_custom_call.1} parent=1 // pred_check
      _
    $region11: #{tpu_custom_call.1} parent=1 // pred_check_branch
      %14 = sbr.rel (0) target = $region13
    $region12: #{tpu_custom_call.1} parent=1 // pred_region
      _
    $region13: #{tpu_custom_call.1} parent=1 // pred_fallthru
      _
    %v15 = vld [vmem:[%s0] sm:$0xff]
    %v16 = vlaneseq
    %v17 = vshrl.u32 %v16, 7
    %v18 = vsub.s32 0, %v17
    %v19 = vrot.slane %v15, %v18
    %21 = vbcast.lane.b32.xlu0 %v19, 256
    %v22 = vpop.permute.xlu0 %21
    %v23 = vlaneseq
    %v24 = vshrl.u32 %v23, 7
    %v25 = vsub.s32 1, %v24
    %v26 = vrot.slane %v15, %v25
    %28 = vbcast.lane.b32.xlu0 %v26, 256
    %v29 = vpop.permute.xlu0 %28
    %v30 = vlaneseq
    %v31 = vshrl.u32 %v30, 7
    %v32 = vsub.s32 2, %v31
    %v33 = vrot.slane %v15, %v32
    %35 = vbcast.lane.b32.xlu0 %v33, 256
    %v36 = vpop.permute.xlu0 %35
    %v37 = vlaneseq
    %v38 = vshrl.u32 %v37, 7
    %v39 = vsub.s32 3, %v38
    %v40 = vrot.slane %v15, %v39
    %42 = vbcast.lane.b32.xlu0 %v40, 256
    %v43 = vpop.permute.xlu0 %42
    %v44 = vlaneseq
    %v45 = vshrl.u32 %v44, 7
    %v46 = vsub.s32 4, %v45
    %v47 = vrot.slane %v15, %v46
    %49 = vbcast.lane.b32.xlu0 %v47, 256
    %v50 = vpop.permute.xlu0 %49
    %v51 = vlaneseq
    %v52 = vshrl.u32 %v51, 7
    %v53 = vsub.s32 5, %v52
    %v54 = vrot.slane %v15, %v53
    %56 = vbcast.lane.b32.xlu0 %v54, 256
    %v57 = vpop.permute.xlu0 %56
    %v58 = vlaneseq
    %v59 = vshrl.u32 %v58, 7
    %v60 = vsub.s32 6, %v59
    %v61 = vrot.slane %v15, %v60
    %63 = vbcast.lane.b32.xlu0 %v61, 256
    %v64 = vpop.permute.xlu0 %63
    %v65 = vlaneseq
    %v66 = vshrl.u32 %v65, 7
    %v67 = vsub.s32 7, %v66
    %v68 = vrot.slane %v15, %v67
    %70 = vbcast.lane.b32.xlu0 %v68, 256
    %v71 = vpop.permute.xlu0 %70
    %v72 = vcombine.low %v22, %v36
    %v74 = vunpack.c.l.s4 1983009808
    %v75 = vunpack.c.0.s8 %v74
    %v76 = vlaneseq
    %v77 = vshrl.u32 %v76, 7
    %v78 = vsub.s32 %v75, %v77
    %v79 = vrot.slane %v72, %v78
    %v80 = vcombine.low %v29, %v43
    %v82 = vunpack.c.l.s4 1983009808
    %v83 = vunpack.c.0.s8 %v82
    %v84 = vlaneseq
    %v85 = vshrl.u32 %v84, 7
    %v86 = vsub.s32 %v83, %v85
    %v87 = vrot.slane %v80, %v86
    %v88 = vcombine.low %v50, %v64
    %v90 = vunpack.c.l.s4 1983009808
    %v91 = vunpack.c.0.s8 %v90
    %v92 = vlaneseq
    %v93 = vshrl.u32 %v92, 7
    %v94 = vsub.s32 %v91, %v93
    %v95 = vrot.slane %v88, %v94
    %v96 = vcombine.low %v57, %v71
    %v98 = vunpack.c.l.s4 1983009808
    %v99 = vunpack.c.0.s8 %v98
    %v100 = vlaneseq
    %v101 = vshrl.u32 %v100, 7
    %v102 = vsub.s32 %v99, %v101
    %v103 = vrot.slane %v96, %v102
    %v104 = vcombine.low %v79, %v87
    %v105 = vcombine.high %v79, %v87
    %v107 = vunpack.c.l.s4 1934713408
    %v108 = vunpack.c.0.s8 %v107
    %v109 = vlaneseq
    %v110 = vshrl.u32 %v109, 7
    %v111 = vsub.s32 %v108, %v110
    %v112 = vrot.slane %v104, %v111
    %v114 = vunpack.c.l.s4 1934713408
    %v115 = vunpack.c.0.s8 %v114
    %v116 = vlaneseq
    %v117 = vshrl.u32 %v116, 7
    %v118 = vsub.s32 %v115, %v117
    %v119 = vrot.slane %v105, %v118
    %v120 = vcombine.low %v95, %v103
    %v121 = vcombine.high %v95, %v103
    %v123 = vunpack.c.l.s4 1934713408
    %v124 = vunpack.c.0.s8 %v123
    %v125 = vlaneseq
    %v126 = vshrl.u32 %v125, 7
    %v127 = vsub.s32 %v124, %v126
    %v128 = vrot.slane %v120, %v127
    %v130 = vunpack.c.l.s4 1934713408
    %v131 = vunpack.c.0.s8 %v130
    %v132 = vlaneseq
    %v133 = vshrl.u32 %v132, 7
    %v134 = vsub.s32 %v131, %v133
    %v135 = vrot.slane %v121, %v134
    %v136 = vcombine.low %v112, %v128
    %v137 = vcombine.high %v112, %v128
    %v138 = vcombine.low %v119, %v135
    %v139 = vcombine.high %v119, %v135
    %141 = vrot.lane.b32.xlu0 %v137, 32
    %v142 = vpop.permute.xlu0 %141
    %145 = vrot.lane.b32.xlu0 %v138, 64
    %v146 = vpop.permute.xlu0 %145
    %149 = vrot.lane.b32.xlu0 %v139, 96
    %v150 = vpop.permute.xlu0 %149
    %vm152 = vcmask 261120
    %v153 = vsel %vm152, %v136, %v142
    %vm154 = vcmask 523264
    %v155 = vsel %vm154, %v153, %v146
    %vm156 = vcmask 785408
    %v157 = vsel %vm156, %v155, %v150
    %v158 = vld [vmem:[%s1] sm:$0x1]
    %v160 = vlaneseq
    %v161 = vshrl.u32 %v160, 7
    %v162 = vsub.s32 0, %v161
    %v163 = vrot.slane %v158, %v162
    %v165 = vmul.f32 %v157, %v163
    %v166 = vld [vmem:[%s2] sm:$0x1]
    %v168 = vlaneseq
    %v169 = vshrl.u32 %v168, 7
    %v170 = vsub.s32 0, %v169
    %v171 = vrot.slane %v166, %v170
    %v173 = vadd.f32 %v165, %v171
    %v174 = vlaneseq
    %v175 = vand.u32 %v174, 127
    %vm176 = vcmp.lt.s32.totalorder %v175, 0
    %v177 = vsub.s32 0, %v175
    %v178 = vsel %vm176, %v177, %v175
    %v179 = vshrl.u32 %v178, 5
    %v180 = vand.u32 %v178, 31
    %v181 = vsub.s32 0, %v180
    %v182 = vsel %vm176, %v181, %v180
    %vm183 = vcmp.ne.s32.totalorder %v182, 0
    %vm184 = vcmp.lt.s32.totalorder %v182, 0
    %vm185 = vmand %vm184, %vm183
    %v186 = vadd.s32 %v182, 32
    %v187 = vsel %vm185, %v186, %v182
    %vm188 = vcmp.lt.s32.totalorder %v187, 1
    %v189 = vand.u32 2147483647, %v173
    %vm190 = vcmp.le.f32.partialorder %v189, 0.7853982
    %vm191 = vcmp.lt.s32.totalorder %v173, 0
    %v192 = vand.u32 %v173, 2139095040
    %v193 = vshrl.u32 %v192, 23
    %v194 = vsub.s32 %v193, 127
    %v195 = vand.u32 2147483647, %v173
    %v196 = vand.u32 %v195, 8388607
    %v197 = vor.u32 %v196, 8388608
    %v198 = vsub.s32 0, %v197
    %v199 = vadd.s32 %v194, 1
    %vm200 = vcmp.gt.s32.totalorder %v199, 0
    %v201 = vsel %vm200, %v199, 0
    %v202 = vshrl.u32 %v201, 5
    %v203 = vand.u32 %v201, 31
    %v204 = vsub.s32 32, %v203
    %v205 = vshrl.u32 683565275, %v204
    %v206 = vshll.u32 683565275, %v203
    %v207 = vshrl.u32 2475754826, %v204
    %v208 = vor.u32 %v206, %v207
    %v209 = vshll.u32 2475754826, %v203
    %v210 = vshrl.u32 2131351028, %v204
    %v211 = vor.u32 %v209, %v210
    %v212 = vshll.u32 2131351028, %v203
    %v213 = vshrl.u32 2102212464, %v204
    %v214 = vor.u32 %v212, %v213
    %v215 = vshll.u32 2102212464, %v203
    %v216 = vshrl.u32 920167782, %v204
    %v217 = vor.u32 %v215, %v216
    %v218 = vshll.u32 920167782, %v203
    %v219 = vshrl.u32 1326507024, %v204
    %v220 = vor.u32 %v218, %v219
    %vm221 = vcmp.lt.s32.totalorder %v202, 1
    %vm222 = vcmp.lt.s32.totalorder %v202, 2
    %vm223 = vcmp.lt.s32.totalorder %v202, 3
    %vm224 = vcmp.lt.s32.totalorder %v202, 4
    %v225 = vsel %vm221, %v205, %v208
    %v226 = vsel %vm224, %v214, 2102212464
    %v227 = vsel %vm223, %v211, %v226
    %v228 = vsel %vm222, %v225, %v227
    %v229 = vsel %vm221, %v208, %v211
    %v230 = vsel %vm224, %v217, 920167782
    %v231 = vsel %vm223, %v214, %v230
    %v232 = vsel %vm222, %v229, %v231
    %v233 = vsel %vm221, %v211, %v214
    %v234 = vsel %vm224, %v220, 1326507024
    %v235 = vsel %vm223, %v217, %v234
    %v236 = vsel %vm222, %v233, %v235
    %v237 = vshll.u32 %v197, 8
    %v238 = vmul.u32.u64.compose %v237, %v236
    %v239 = vextract.low.u32 %v238
    %v240 = vextract.high.u32 %v238
    %v241 = vmul.u32.u64.compose %v237, %v232
    %v242 = vextract.low.u32 %v241
    %v243 = vextract.high.u32 %v241
    %v244 = vmul.u32 %v237, %v228
    %v245 = vadd.s32 %v240, %v242
    %vm246 = vc.u32 %v240, %v242
    %v247 = vadd.s32 %v243, 1
    %v248 = vsel %vm246, %v247, %v243
    %v249 = vadd.s32 %v244, %v248
    %v250 = vadd.s32 %v249, 536870912
    %v251 = vshrl.u32 %v250, 30
    %v252 = vshll.u32 %v251, 30
    %v253 = vsub.s32 %v249, %v252
    %vm254 = vcmp.lt.s32.totalorder %v253, 0
    %v255 = vsub.s32 0, %v253
    %v256 = vsel %vm254, %v255, %v253
    %v257 = vclz %v256
    %v258 = vsub.s32 %v257, 2
    %vm259 = vcmp.gt.s32.totalorder 0, %v258
    %v260 = vsel %vm259, 0, %v258
    %v261 = vsub.s32 32, %v260
    %v262 = vshll.u32 %v253, %v260
    %v263 = vshrl.u32 %v245, %v261
    %v264 = vor.u32 %v262, %v263
    %v265 = vsub.s32 4294967266, %v260
    %v266 = vadd.s32 %v265, 127
    %v267 = vshll.u32 %v266, 23
    %v268 = vor.u32 4788187, %v267
    %v269 = vand.u32 2147483647, %v268
    %v271 = vcvt.s32.f32 %v264
    %v272 = vmul.f32 %v271, %v269
    %v273 = vxor.u32 %v272, 2147483648
    %v274 = vsel %vm191, %v273, %v272
    %v275 = vsub.s32 4, %v251
    %v276 = vsel %vm191, %v275, %v251
    %v277 = vsel %vm190, %v173, %v274
    %v278 = vsel %vm190, 0, %v276
    %v279 = vcosq.f32.pop %v277
    %v280 = vsinq.f32.pop %v277
    %vm281 = vweird.f32 %v173
    %v282 = vadd.s32 %v278, 3
    %v283 = vand.u32 %v282, 3
    %vm284 = vcmp.lt.s32.totalorder %v283, 2
    %vm285 = vcmp.eq.s32.totalorder %v283, 0
    %v286 = vxor.u32 %v280, 2147483648
    %v287 = vsel %vm285, %v279, %v286
    %vm288 = vcmp.eq.s32.totalorder %v283, 2
    %v289 = vxor.u32 %v279, 2147483648
    %v290 = vsel %vm288, %v289, %v280
    %v291 = vsel %vm284, %v287, %v290
    %v292 = vsel %vm281, nan, %v291
    %v293 = vsel %vm188, %v173, %v292
    %294 = vst [vmem:[#allocation2] sm:$0xff] %v293
    // Predicated region
    $region14: #{tpu_custom_call.1} parent=1 // pred_check
      _
    $region15: #{tpu_custom_call.1} parent=1 // pred_check_branch
      %296 = sbr.rel (0) target = $region17
    $region16: #{tpu_custom_call.1} parent=1 // pred_region
      %s298 = ssub.s32 128, 128
      %299 = vsyncadd [#allocation3], %s298
      %s301 = sshll.u32 [#allocation2], 4
      %s302 = int_to_ptr.vmem [resolvable:$true] %s301
      %304 = dma.vmem_to_hbm [thread:$0]  %s302, 128, %s3, [#allocation3]
    $region17: #{tpu_custom_call.1} parent=1 // pred_fallthru
      _
    // Predicated region
    $region18: #{tpu_custom_call.1} parent=1 // pred_check
      _
    $region19: #{tpu_custom_call.1} parent=1 // pred_check_branch
      %306 = sbr.rel (0) target = $region21
    $region20: #{tpu_custom_call.1} parent=1 // pred_region
      %307 = dma.done [#allocation3], 128
    $region21: #{tpu_custom_call.1} parent=1 // pred_fallthru
      _
    %308 = vsyncpa [#allocation3], 1

</llo_original>
